<compile_context>
chip_gen: v6e
topology: v6e:2x2x1
jax: 0.10.0
libtpu: 0.0.40
codegen_flags: <defaults>
</compile_context>

<pallas_src>
import functools
import math

import jax
import jax.numpy as jnp
from jax.experimental import pallas as pl
from jax.experimental.pallas import tpu as pltpu

LN_EPS = 1e-5


def _round_up(x, m):
    return ((x + m - 1) // m) * m


def _layernorm(x, gamma, beta):
    # PyTorch nn.LayerNorm: biased variance, eps inside sqrt. (Reference path.)
    mean = jnp.mean(x, axis=-1, keepdims=True)
    var = jnp.mean((x - mean) ** 2, axis=-1, keepdims=True)
    inv = jax.lax.rsqrt(var + LN_EPS)
    return (x - mean) * inv * gamma + beta


def _masked_layernorm(x, gamma, beta, mask, inv_e):
    # x has exact zeros in the padded lanes (weights/bias columns are zero-padded),
    # so sum over all lanes == sum over real lanes; divide by the true E.
    mean = jnp.sum(x, axis=-1, keepdims=True) * inv_e
    xc = (x - mean) * mask                       # zero out padded lanes
    var = jnp.sum(xc * xc, axis=-1, keepdims=True) * inv_e
    inv = jax.lax.rsqrt(var + LN_EPS)
    return xc * inv * gamma + beta               # padded lanes: 0*gamma(0)+beta(0) = 0


def _expand_vis_emb_kernel(
    feats_ref,      # [tile_m, feat_dim]   (caller dtype; bf16 recommended)
    pos_ref,        # [tile_m, 4]          (x1, x2, y1, y2)
    wf_ref,         # [feat_dim, E_pad]    feat Linear weight (zero-padded cols)
    pp_ref,         # [16, E_pad]          packed params, see row layout below
    order_ref,      # [tile_m, E_pad]      img_order_emb + obj_order_emb per tile row
    out_ref,        # [tile_m, E_pad]
    *,
    inv_e,
):
    pp = pp_ref[...]                                  # f32 [16, E_pad]
    bf, gf, betaf = pp[0:1], pp[1:2], pp[2:3]
    w_x1, w_x2, w_y1, w_y2, w_ar = pp[3:4], pp[4:5], pp[5:6], pp[6:7], pp[7:8]
    bp, gp, betap = pp[8:9], pp[9:10], pp[10:11]
    mask = pp[11:12]                                  # 1.0 on real lanes, 0.0 on padding

    # ---- feat branch: MXU matmul in native dtype, f32 accumulation, f32 LN ----
    fe = jnp.dot(feats_ref[...], wf_ref[...],
                 preferred_element_type=jnp.float32) + bf
    fe = _masked_layernorm(fe, gf, betaf, mask, inv_e)

    # ---- pos branch: K=5 contraction as rank-1 VPU FMAs (no MXU pass) ----------
    pos = pos_ref[...].astype(jnp.float32)
    x1, x2, y1, y2 = pos[:, 0:1], pos[:, 1:2], pos[:, 2:3], pos[:, 3:4]
    area = (y2 - y1) * (x2 - x1)                      # [tile_m, 1]
    pe = x1 * w_x1 + x2 * w_x2 + y1 * w_y1 + y2 * w_y2 + area * w_ar + bp
    pe = _masked_layernorm(pe, gp, betap, mask, inv_e)

    # ---- sum with order embeddings ---------------------------------------------
    out_ref[...] = (fe + pe + order_ref[...]).astype(out_ref.dtype)


def expand_visual_embedding(feats, pos, params, *, n_image_tokens, target_tile_m=256):
    """feats: [B, N, feat_dim], pos: [B, N, 4] -> [B, n_image_tokens, N*d_model].

    target_tile_m ~256 is a good default for v7x (64 MiB VMEM); 512 is fine on
    v5e/v6e (128 MiB VMEM). For very large feat_dim*E configs, also raise
    pltpu.CompilerParams(vmem_limit_bytes=...) and/or pass bf16 feats (wf follows).
    """
    B, N, feat_dim = feats.shape
    assert pos.shape == (B, N, 4)
    E = params["wf"].shape[1]                 # n_image_tokens * d_model
    M = B * N

    # Lane-dense output: pad E up to a multiple of 128.
    E_pad = _round_up(E, 128)

    # tile_m: multiple of lcm(N, 8) so (a) the sublane dim is aligned and (b) every
    # grid step sees the same [tile_m, E] order-embedding block (tile_m % N == 0).
    unit = (N * 8) // math.gcd(N, 8)
    tile_m = min(_round_up(M, unit), _round_up(target_tile_m, unit))
    M_pad = _round_up(M, tile_m)
    grid = (M_pad // tile_m,)

    # ---- inputs: flatten rows, zero-pad to M_pad --------------------------------
    feats_flat = feats.reshape(M, feat_dim)
    pos_flat = pos.reshape(M, 4).astype(jnp.float32)
    if M_pad != M:
        feats_flat = jnp.zeros((M_pad, feat_dim), feats.dtype).at[:M].set(feats_flat)
        pos_flat = jnp.zeros((M_pad, 4), jnp.float32).at[:M].set(pos_flat)

    # ---- feat weight: caller dtype (bf16-native MXU when feats are bf16), pad E --
    wf = params["wf"].astype(feats.dtype)
    wf_p = jnp.zeros((feat_dim, E_pad), feats.dtype).at[:, :E].set(wf)

    # ---- pack the small per-lane params into one [16, E_pad] block ---------------
    # rows: 0 bf, 1 gf, 2 betaf, 3..7 wp (x1,x2,y1,y2,area), 8 bp, 9 gp, 10 betap, 11 mask
    def row(x):
        return jnp.reshape(x, (1, E)).astype(jnp.float32)

    rows = jnp.concatenate(
        [row(params["bf"]), row(params["gf"]), row(params["betaf"]),
         params["wp"].astype(jnp.float32),
         row(params["bp"]), row(params["gp"]), row(params["betap"]),
         jnp.ones((1, E), jnp.float32)],               # lane mask (real lanes = 1)
        axis=0)                                        # [12, E]
    packed = jnp.zeros((16, E_pad), jnp.float32).at[:12, :E].set(rows)

    # ---- order embeddings: one small [tile_m, E_pad] block, reused by all steps ---
    # Default ids (glue): img_order_ids = zeros(N) -> row 0; obj_order_ids = arange(N).
    # TODO(synk): non-default img_order_ids / obj_order_ids would need a wrapper-side
    # gather (or scalar-prefetch indexed DMA); only the default-ids path is implemented.
    img_order_emb = params["img_order_table"][0][None, :]
    obj_order_emb = params["obj_order_table"][:N]
    order_small = (img_order_emb + obj_order_emb).astype(jnp.float32)      # [N, E]
    order_block = jnp.tile(order_small, (tile_m // N, 1))                  # [tile_m, E]
    order_block = jnp.zeros((tile_m, E_pad), jnp.float32).at[:, :E].set(order_block)

    kernel = functools.partial(_expand_vis_emb_kernel, inv_e=1.0 / E)

    out_flat = pl.pallas_call(
        kernel,
        out_shape=jax.ShapeDtypeStruct((M_pad, E_pad), feats.dtype),
        grid_spec=pltpu.PrefetchScalarGridSpec(
            num_scalar_prefetch=0,
            grid=grid,
            in_specs=[
                pl.BlockSpec((tile_m, feat_dim), lambda i: (i, 0)),   # feats rows
                pl.BlockSpec((tile_m, 4), lambda i: (i, 0)),          # pos rows
                pl.BlockSpec((feat_dim, E_pad), lambda i: (0, 0)),    # wf (resident)
                pl.BlockSpec((16, E_pad), lambda i: (0, 0)),          # packed params
                pl.BlockSpec((tile_m, E_pad), lambda i: (0, 0)),      # order block
            ],
            out_specs=pl.BlockSpec((tile_m, E_pad), lambda i: (i, 0)),
        ),
        compiler_params=pltpu.CompilerParams(
            dimension_semantics=("parallel",)),        # shards rows across v7x's 2 TCs
    )(feats_flat, pos_flat, wf_p, packed, order_block)

    # Drop padding, then pure reshape exactly as the torch module does.
    out = out_flat[:M, :E].reshape(B, N, E)
    return out.reshape(B, n_image_tokens, -1)


def reference(feats, pos, params, *, n_image_tokens):
    """Pure-JAX reference mirroring the PyTorch forward (f32)."""
    B, N, _ = feats.shape
    fe = feats @ params["wf"] + params["bf"]
    fe = _layernorm(fe, params["gf"], params["betaf"])
    height = pos[:, :, 3] - pos[:, :, 2]
    width = pos[:, :, 1] - pos[:, :, 0]
    area = (height * width)[..., None]
    pos5 = jnp.concatenate([pos, area], axis=2)
    pe = pos5 @ params["wp"] + params["bp"]
    pe = _layernorm(pe, params["gp"], params["betap"])
    img_e = params["img_order_table"][jnp.zeros((N,), jnp.int32)][None]
    obj_e = params["obj_order_table"][jnp.arange(N, dtype=jnp.int32)][None]
    vis = fe + pe + img_e + obj_e
    return vis.reshape(B, n_image_tokens, -1)


if __name__ == "__main__":
    # Small config consistent with the module.
    B, N = 2, 8
    feat_dim, pos_dim = 32, 4
    n_image_tokens, d_model = 2, 32
    n_boxes, n_images = 16, 2
    E = n_image_tokens * d_model

    key = jax.random.PRNGKey(0)
    ks = jax.random.split(key, 10)

    params = {
        "wf": jax.random.normal(ks[0], (feat_dim, E), jnp.float32) * 0.05,
        "bf": jax.random.normal(ks[1], (1, E), jnp.float32) * 0.05,
        "gf": jnp.ones((1, E), jnp.float32),
        "betaf": jnp.zeros((1, E), jnp.float32),
        "wp": jax.random.normal(ks[2], (pos_dim + 1, E), jnp.float32) * 0.05,
        "bp": jax.random.normal(ks[3], (1, E), jnp.float32) * 0.05,
        "gp": jnp.ones((1, E), jnp.float32),
        "betap": jnp.zeros((1, E), jnp.float32),
        "obj_order_table": jax.random.normal(ks[4], (n_boxes, E), jnp.float32) * 0.02,
        "img_order_table": jax.random.normal(ks[5], (n_images, E), jnp.float32) * 0.02,
    }

    feats = jax.random.normal(ks[6], (B, N, feat_dim), jnp.float32)
    xy = jax.random.uniform(ks[7], (B, N, 2), jnp.float32)
    wh = jax.random.uniform(ks[8], (B, N, 2), jnp.float32) * 0.5
    # (x1, x2, y1, y2)
    pos = jnp.stack([xy[..., 0], xy[..., 0] + wh[..., 0],
                     xy[..., 1], xy[..., 1] + wh[..., 1]], axis=-1)

    ref = reference(feats, pos, params, n_image_tokens=n_image_tokens)

    # f32 path: tight check against the f32 reference.
    out = expand_visual_embedding(feats, pos, params, n_image_tokens=n_image_tokens)
    out = jax.block_until_ready(out)
    assert out.shape == (B, n_image_tokens, N * d_model), out.shape
    assert jnp.allclose(out, ref, atol=1e-5, rtol=1e-5), float(jnp.max(jnp.abs(out - ref)))

    # bf16 path (production dtype): feats/wf hit the MXU in bf16, accumulation and
    # LayerNorm stay f32; compare against the f32 reference at bf16 tolerance.
    out_bf = expand_visual_embedding(feats.astype(jnp.bfloat16), pos, params,
                                     n_image_tokens=n_image_tokens)
    out_bf = jax.block_until_ready(out_bf)
    assert jnp.allclose(out_bf.astype(jnp.float32), ref, atol=1e-1, rtol=5e-2), \
        float(jnp.max(jnp.abs(out_bf.astype(jnp.float32) - ref)))

    print("KERNEL_OK")
</pallas_src>

<mosaic_0001>
module attributes {stable_mosaic.version = 11 : i64} {
  func.func @_expand_vis_emb_kernel(%arg0: i32, %arg1: memref<16x32xf32, #tpu.memory_space<vmem>>, %arg2: memref<16x4xf32, #tpu.memory_space<vmem>>, %arg3: memref<32x128xf32, #tpu.memory_space<vmem>>, %arg4: memref<16x128xf32, #tpu.memory_space<vmem>>, %arg5: memref<16x128xf32, #tpu.memory_space<vmem>>, %arg6: memref<16x128xf32, #tpu.memory_space<vmem>>) attributes {dimension_semantics = [#tpu.dimension_semantics<parallel>], iteration_bounds = array<i64: 1>, scalar_prefetch = 0 : i64, scratch_operands = 0 : i64, tpu.core_type = #tpu.core_type<tc>, window_params = [{transform_indices = @transform_0, window_bounds = array<i64: 16, 32>}, {transform_indices = @transform_1, window_bounds = array<i64: 16, 4>}, {pipeline_mode = #tpu.pipeline_mode<synchronous>, transform_indices = @transform_2, window_bounds = array<i64: 32, 128>}, {pipeline_mode = #tpu.pipeline_mode<synchronous>, transform_indices = @transform_3, window_bounds = array<i64: 16, 128>}, {pipeline_mode = #tpu.pipeline_mode<synchronous>, transform_indices = @transform_4, window_bounds = array<i64: 16, 128>}, {transform_indices = @transform_5, window_bounds = array<i64: 16, 128>}]} {
    %c0 = arith.constant 0 : index
    %c0_0 = arith.constant 0 : index
    %0 = vector.load %arg4[%c0, %c0_0] : memref<16x128xf32, #tpu.memory_space<vmem>>, vector<16x128xf32>
    %1 = vector.extract_strided_slice %0 {offsets = [0, 0], sizes = [1, 128], strides = [1, 1]} : vector<16x128xf32> to vector<1x128xf32>
    %2 = vector.extract_strided_slice %0 {offsets = [1, 0], sizes = [1, 128], strides = [1, 1]} : vector<16x128xf32> to vector<1x128xf32>
    %3 = vector.extract_strided_slice %0 {offsets = [2, 0], sizes = [1, 128], strides = [1, 1]} : vector<16x128xf32> to vector<1x128xf32>
    %4 = vector.extract_strided_slice %0 {offsets = [3, 0], sizes = [1, 128], strides = [1, 1]} : vector<16x128xf32> to vector<1x128xf32>
    %5 = vector.extract_strided_slice %0 {offsets = [4, 0], sizes = [1, 128], strides = [1, 1]} : vector<16x128xf32> to vector<1x128xf32>
    %6 = vector.extract_strided_slice %0 {offsets = [5, 0], sizes = [1, 128], strides = [1, 1]} : vector<16x128xf32> to vector<1x128xf32>
    %7 = vector.extract_strided_slice %0 {offsets = [6, 0], sizes = [1, 128], strides = [1, 1]} : vector<16x128xf32> to vector<1x128xf32>
    %8 = vector.extract_strided_slice %0 {offsets = [7, 0], sizes = [1, 128], strides = [1, 1]} : vector<16x128xf32> to vector<1x128xf32>
    %9 = vector.extract_strided_slice %0 {offsets = [8, 0], sizes = [1, 128], strides = [1, 1]} : vector<16x128xf32> to vector<1x128xf32>
    %10 = vector.extract_strided_slice %0 {offsets = [9, 0], sizes = [1, 128], strides = [1, 1]} : vector<16x128xf32> to vector<1x128xf32>
    %11 = vector.extract_strided_slice %0 {offsets = [10, 0], sizes = [1, 128], strides = [1, 1]} : vector<16x128xf32> to vector<1x128xf32>
    %12 = vector.extract_strided_slice %0 {offsets = [11, 0], sizes = [1, 128], strides = [1, 1]} : vector<16x128xf32> to vector<1x128xf32>
    %c0_1 = arith.constant 0 : index
    %c0_2 = arith.constant 0 : index
    %13 = vector.load %arg1[%c0_1, %c0_2] : memref<16x32xf32, #tpu.memory_space<vmem>>, vector<16x32xf32>
    %c0_3 = arith.constant 0 : index
    %c0_4 = arith.constant 0 : index
    %14 = vector.load %arg3[%c0_3, %c0_4] : memref<32x128xf32, #tpu.memory_space<vmem>>, vector<32x128xf32>
    %cst = arith.constant dense<0.000000e+00> : vector<16x128xf32>
    %15 = tpu.matmul %13, %14, %cst {dimension_numbers = #tpu.dot_dimension_numbers<[1], [0], [0], [1], [0, 0, 1, 1], [], []>} : vector<16x32xf32>, vector<32x128xf32>, vector<16x128xf32> -> vector<16x128xf32>
    %16 = vector.broadcast %1 : vector<1x128xf32> to vector<16x128xf32>
    %17 = arith.addf %15, %16 : vector<16x128xf32>
    %cst_5 = arith.constant dense<0.000000e+00> : vector<16xf32>
    %18 = vector.multi_reduction <add>, %17, %cst_5 [1] : vector<16x128xf32> to vector<16xf32>
    %19 = vector.shape_cast %18 : vector<16xf32> to vector<16x1xf32>
    %cst_6 = arith.constant 1.562500e-02 : f32
    %20 = vector.broadcast %cst_6 : f32 to vector<16x1xf32>
    %21 = arith.mulf %19, %20 : vector<16x1xf32>
    %22 = vector.broadcast %21 : vector<16x1xf32> to vector<16x128xf32>
    %23 = arith.subf %17, %22 : vector<16x128xf32>
    %24 = vector.broadcast %12 : vector<1x128xf32> to vector<16x128xf32>
    %25 = arith.mulf %23, %24 : vector<16x128xf32>
    %26 = arith.mulf %25, %25 : vector<16x128xf32>
    %cst_7 = arith.constant dense<0.000000e+00> : vector<16xf32>
    %27 = vector.multi_reduction <add>, %26, %cst_7 [1] : vector<16x128xf32> to vector<16xf32>
    %28 = vector.shape_cast %27 : vector<16xf32> to vector<16x1xf32>
    %cst_8 = arith.constant 1.562500e-02 : f32
    %29 = vector.broadcast %cst_8 : f32 to vector<16x1xf32>
    %30 = arith.mulf %28, %29 : vector<16x1xf32>
    %cst_9 = arith.constant 9.99999974E-6 : f32
    %31 = vector.broadcast %cst_9 : f32 to vector<16x1xf32>
    %32 = arith.addf %30, %31 : vector<16x1xf32>
    %33 = math.rsqrt %32 : vector<16x1xf32>
    %34 = vector.broadcast %33 : vector<16x1xf32> to vector<16x128xf32>
    %35 = arith.mulf %25, %34 : vector<16x128xf32>
    %36 = vector.broadcast %2 : vector<1x128xf32> to vector<16x128xf32>
    %37 = arith.mulf %35, %36 : vector<16x128xf32>
    %38 = vector.broadcast %3 : vector<1x128xf32> to vector<16x128xf32>
    %39 = arith.addf %37, %38 : vector<16x128xf32>
    %c0_10 = arith.constant 0 : index
    %c0_11 = arith.constant 0 : index
    %40 = vector.load %arg2[%c0_10, %c0_11] : memref<16x4xf32, #tpu.memory_space<vmem>>, vector<16x4xf32>
    %41 = vector.extract_strided_slice %40 {offsets = [0, 0], sizes = [16, 1], strides = [1, 1]} : vector<16x4xf32> to vector<16x1xf32>
    %42 = vector.extract_strided_slice %40 {offsets = [0, 1], sizes = [16, 1], strides = [1, 1]} : vector<16x4xf32> to vector<16x1xf32>
    %43 = vector.extract_strided_slice %40 {offsets = [0, 2], sizes = [16, 1], strides = [1, 1]} : vector<16x4xf32> to vector<16x1xf32>
    %44 = vector.extract_strided_slice %40 {offsets = [0, 3], sizes = [16, 1], strides = [1, 1]} : vector<16x4xf32> to vector<16x1xf32>
    %45 = arith.subf %44, %43 : vector<16x1xf32>
    %46 = arith.subf %42, %41 : vector<16x1xf32>
    %47 = arith.mulf %45, %46 : vector<16x1xf32>
    %48 = vector.broadcast %41 : vector<16x1xf32> to vector<16x128xf32>
    %49 = vector.broadcast %4 : vector<1x128xf32> to vector<16x128xf32>
    %50 = arith.mulf %48, %49 : vector<16x128xf32>
    %51 = vector.broadcast %42 : vector<16x1xf32> to vector<16x128xf32>
    %52 = vector.broadcast %5 : vector<1x128xf32> to vector<16x128xf32>
    %53 = arith.mulf %51, %52 : vector<16x128xf32>
    %54 = arith.addf %50, %53 : vector<16x128xf32>
    %55 = vector.broadcast %43 : vector<16x1xf32> to vector<16x128xf32>
    %56 = vector.broadcast %6 : vector<1x128xf32> to vector<16x128xf32>
    %57 = arith.mulf %55, %56 : vector<16x128xf32>
    %58 = arith.addf %54, %57 : vector<16x128xf32>
    %59 = vector.broadcast %44 : vector<16x1xf32> to vector<16x128xf32>
    %60 = vector.broadcast %7 : vector<1x128xf32> to vector<16x128xf32>
    %61 = arith.mulf %59, %60 : vector<16x128xf32>
    %62 = arith.addf %58, %61 : vector<16x128xf32>
    %63 = vector.broadcast %47 : vector<16x1xf32> to vector<16x128xf32>
    %64 = vector.broadcast %8 : vector<1x128xf32> to vector<16x128xf32>
    %65 = arith.mulf %63, %64 : vector<16x128xf32>
    %66 = arith.addf %62, %65 : vector<16x128xf32>
    %67 = vector.broadcast %9 : vector<1x128xf32> to vector<16x128xf32>
    %68 = arith.addf %66, %67 : vector<16x128xf32>
    %cst_12 = arith.constant dense<0.000000e+00> : vector<16xf32>
    %69 = vector.multi_reduction <add>, %68, %cst_12 [1] : vector<16x128xf32> to vector<16xf32>
    %70 = vector.shape_cast %69 : vector<16xf32> to vector<16x1xf32>
    %cst_13 = arith.constant 1.562500e-02 : f32
    %71 = vector.broadcast %cst_13 : f32 to vector<16x1xf32>
    %72 = arith.mulf %70, %71 : vector<16x1xf32>
    %73 = vector.broadcast %72 : vector<16x1xf32> to vector<16x128xf32>
    %74 = arith.subf %68, %73 : vector<16x128xf32>
    %75 = vector.broadcast %12 : vector<1x128xf32> to vector<16x128xf32>
    %76 = arith.mulf %74, %75 : vector<16x128xf32>
    %77 = arith.mulf %76, %76 : vector<16x128xf32>
    %cst_14 = arith.constant dense<0.000000e+00> : vector<16xf32>
    %78 = vector.multi_reduction <add>, %77, %cst_14 [1] : vector<16x128xf32> to vector<16xf32>
    %79 = vector.shape_cast %78 : vector<16xf32> to vector<16x1xf32>
    %cst_15 = arith.constant 1.562500e-02 : f32
    %80 = vector.broadcast %cst_15 : f32 to vector<16x1xf32>
    %81 = arith.mulf %79, %80 : vector<16x1xf32>
    %cst_16 = arith.constant 9.99999974E-6 : f32
    %82 = vector.broadcast %cst_16 : f32 to vector<16x1xf32>
    %83 = arith.addf %81, %82 : vector<16x1xf32>
    %84 = math.rsqrt %83 : vector<16x1xf32>
    %85 = vector.broadcast %84 : vector<16x1xf32> to vector<16x128xf32>
    %86 = arith.mulf %76, %85 : vector<16x128xf32>
    %87 = vector.broadcast %10 : vector<1x128xf32> to vector<16x128xf32>
    %88 = arith.mulf %86, %87 : vector<16x128xf32>
    %89 = vector.broadcast %11 : vector<1x128xf32> to vector<16x128xf32>
    %90 = arith.addf %88, %89 : vector<16x128xf32>
    %91 = arith.addf %39, %90 : vector<16x128xf32>
    %c0_17 = arith.constant 0 : index
    %c0_18 = arith.constant 0 : index
    %92 = vector.load %arg5[%c0_17, %c0_18] : memref<16x128xf32, #tpu.memory_space<vmem>>, vector<16x128xf32>
    %93 = arith.addf %91, %92 : vector<16x128xf32>
    %c0_19 = arith.constant 0 : index
    %c0_20 = arith.constant 0 : index
    %94 = vector.load %arg6[%c0_19, %c0_20] : memref<16x128xf32, #tpu.memory_space<vmem>>, vector<16x128xf32>
    tpu.vector_store %arg6[%c0_19, %c0_20], %93 {strides = array<i32>} : memref<16x128xf32, #tpu.memory_space<vmem>>, vector<16x128xf32>,
    return
  }
  func.func @transform_0(%arg0: i32) -> (i32, i32) {
    %c0_i32 = arith.constant 0 : i32
    %c0_i32_0 = arith.constant 0 : i32
    return %arg0, %c0_i32 : i32, i32
  }
  func.func @transform_1(%arg0: i32) -> (i32, i32) {
    %c0_i32 = arith.constant 0 : i32
    %c0_i32_0 = arith.constant 0 : i32
    return %arg0, %c0_i32 : i32, i32
  }
  func.func @transform_2(%arg0: i32) -> (i32, i32) {
    %c0_i32 = arith.constant 0 : i32
    %c0_i32_0 = arith.constant 0 : i32
    %c0_i32_1 = arith.constant 0 : i32
    return %c0_i32, %c0_i32_0 : i32, i32
  }
  func.func @transform_3(%arg0: i32) -> (i32, i32) {
    %c0_i32 = arith.constant 0 : i32
    %c0_i32_0 = arith.constant 0 : i32
    %c0_i32_1 = arith.constant 0 : i32
    return %c0_i32, %c0_i32_0 : i32, i32
  }
  func.func @transform_4(%arg0: i32) -> (i32, i32) {
    %c0_i32 = arith.constant 0 : i32
    %c0_i32_0 = arith.constant 0 : i32
    %c0_i32_1 = arith.constant 0 : i32
    return %c0_i32, %c0_i32_0 : i32, i32
  }
  func.func @transform_5(%arg0: i32) -> (i32, i32) {
    %c0_i32 = arith.constant 0 : i32
    %c0_i32_0 = arith.constant 0 : i32
    return %arg0, %c0_i32 : i32, i32
  }
}

</mosaic_0001>

<llo_original>
// kernel: tpu_custom_call.1
$region0: #{tpu_custom_call.1}
  #allocation0 [shape = 'u32[]', space=smem, size = 0x4, offset = 0x4, fixed_abs, tag = 'smem constant byte address 0x4 - core index']
  #allocation1 [shape = 'u32[144,128]{1,0:T(1,128)}', space=vmem, size = 0x12000, scoped, tag = 'internal scratch']
  %s0 = inlined_call_operand.vmem [shape: f32[16,32], index: 0, kind: input, shape index: {}]
  %s1 = inlined_call_operand.vmem [shape: f32[16,4], index: 1, kind: input, shape index: {}]
  %s2 = inlined_call_operand.hbm [shape: f32[32,128], index: 2, kind: input, shape index: {}]
  %s3 = inlined_call_operand.hbm [shape: f32[16,128], index: 3, kind: input, shape index: {}]
  %s4 = inlined_call_operand.hbm [shape: f32[16,128], index: 4, kind: input, shape index: {}]
  %s5 = inlined_call_operand.hbm [shape: f32[16,128], index: 5, kind: output, shape index: {}]
  %s6 = sld [smem:[#allocation0]]
  $region42: #{tpu_custom_call.1} parent=0
    _
  %s8 = ssub.s32 1, %s6
  %s9 = scalar_select 0, %s8, %s6
  $region1: #{tpu_custom_call.1} parent=0
    #allocation2 [shape = 'u8[16384]{0}', space=vmem, size = 0x4000, scoped, tag = 'input window, operand 2, single buffered']
    #allocation3 [shape = 's32[1]{0}', space=sflag, size = 0x4, scoped, tag = 'scoped memory for tpu_custom_call.1']
    #allocation4 [shape = 's32[1]{0}', space=sflag, size = 0x4, scoped, tag = 'scoped memory for tpu_custom_call.1']
    #allocation5 [shape = 'u8[8192]{0}', space=vmem, size = 0x2000, scoped, tag = 'input window, operand 3, single buffered']
    #allocation6 [shape = 's32[1]{0}', space=sflag, size = 0x4, scoped, tag = 'scoped memory for tpu_custom_call.1']
    #allocation7 [shape = 'u8[8192]{0}', space=vmem, size = 0x2000, scoped, tag = 'input window, operand 4, single buffered']
    #allocation8 [shape = 'u8[8192]{0}', space=vmem, size = 0x2000, scoped, tag = 'output window, operand 0, single buffered']
    %10 = vsyncpa [#allocation3], 0
    %11 = vsyncpa [#allocation6], 0
    %12 = vsyncpa [#allocation4], 0
    // Predicated region
    $region2: #{tpu_custom_call.1} parent=1 // pred_check
      _
    $region3: #{tpu_custom_call.1} parent=1 // pred_check_branch
      %14 = sbr.rel (0) target = $region5
    $region4: #{tpu_custom_call.1} parent=1 // pred_region
      _
    $region5: #{tpu_custom_call.1} parent=1 // pred_fallthru
      _
    // Predicated region
    $region6: #{tpu_custom_call.1} parent=1 // pred_check
      _
    $region7: #{tpu_custom_call.1} parent=1 // pred_check_branch
      %16 = sbr.rel (0) target = $region9
    $region8: #{tpu_custom_call.1} parent=1 // pred_region
      _
    $region9: #{tpu_custom_call.1} parent=1 // pred_fallthru
      _
    // Predicated region
    $region10: #{tpu_custom_call.1} parent=1 // pred_check
      _
    $region11: #{tpu_custom_call.1} parent=1 // pred_check_branch
      %18 = sbr.rel (0) target = $region13
    $region12: #{tpu_custom_call.1} parent=1 // pred_region
      %s20 = ssub.s32 512, 512
      %21 = vsyncadd [#allocation3], %s20
      %s22 = sshll.u32 [#allocation2], 4
      %s23 = int_to_ptr.vmem [resolvable:$true] %s22
      %28 = dma.hbm_to_vmem [thread:$0]  %s2, 512, %s23, [#allocation3], 128, 128, 8
    $region13: #{tpu_custom_call.1} parent=1 // pred_fallthru
      _
    // Predicated region
    $region14: #{tpu_custom_call.1} parent=1 // pred_check
      _
    $region15: #{tpu_custom_call.1} parent=1 // pred_check_branch
      %30 = sbr.rel (0) target = $region17
    $region16: #{tpu_custom_call.1} parent=1 // pred_region
      %s32 = ssub.s32 256, 256
      %33 = vsyncadd [#allocation6], %s32
      %s34 = sshll.u32 [#allocation5], 4
      %s35 = int_to_ptr.vmem [resolvable:$true] %s34
      %40 = dma.hbm_to_vmem [thread:$0]  %s3, 256, %s35, [#allocation6], 128, 128, 8
    $region17: #{tpu_custom_call.1} parent=1 // pred_fallthru
      _
    // Predicated region
    $region18: #{tpu_custom_call.1} parent=1 // pred_check
      _
    $region19: #{tpu_custom_call.1} parent=1 // pred_check_branch
      %42 = sbr.rel (0) target = $region21
    $region20: #{tpu_custom_call.1} parent=1 // pred_region
      %s44 = ssub.s32 256, 256
      %45 = vsyncadd [#allocation6], %s44
      %s46 = sshll.u32 [#allocation7], 4
      %s47 = int_to_ptr.vmem [resolvable:$true] %s46
      %52 = dma.hbm_to_vmem [thread:$0]  %s4, 256, %s47, [#allocation6], 128, 128, 8
    $region21: #{tpu_custom_call.1} parent=1 // pred_fallthru
      _
    // Predicated region
    $region22: #{tpu_custom_call.1} parent=1 // pred_check
      _
    $region23: #{tpu_custom_call.1} parent=1 // pred_check_branch
      %54 = sbr.rel (0) target = $region25
    $region24: #{tpu_custom_call.1} parent=1 // pred_region
      %55 = dma.done [#allocation3], 512
    $region25: #{tpu_custom_call.1} parent=1 // pred_fallthru
      _
    // Predicated region
    $region26: #{tpu_custom_call.1} parent=1 // pred_check
      _
    $region27: #{tpu_custom_call.1} parent=1 // pred_check_branch
      %57 = sbr.rel (0) target = $region29
    $region28: #{tpu_custom_call.1} parent=1 // pred_region
      %58 = dma.done [#allocation6], 256
    $region29: #{tpu_custom_call.1} parent=1 // pred_fallthru
      _
    // Predicated region
    $region30: #{tpu_custom_call.1} parent=1 // pred_check
      _
    $region31: #{tpu_custom_call.1} parent=1 // pred_check_branch
      %60 = sbr.rel (0) target = $region33
    $region32: #{tpu_custom_call.1} parent=1 // pred_region
      %61 = dma.done [#allocation6], 256
    $region33: #{tpu_custom_call.1} parent=1 // pred_fallthru
      _
    %v62 = vld [vmem:[#allocation5] sm:$0xff]
    %v63 = vld [vmem:[#allocation5 + $0x8] sm:$0xff]
    %v64 = vld [vmem:[%s0] sm:$0xff]
    %v65 = vld [vmem:[%s0 + $0x8] sm:$0xff]
    %v66 = vld [vmem:[#allocation2] sm:$0xff]
    %v67 = vld [vmem:[#allocation2 + $0x8] sm:$0xff]
    %v68 = vld [vmem:[#allocation2 + $0x10] sm:$0xff]
    %v69 = vld [vmem:[#allocation2 + $0x18] sm:$0xff]
    %v70 = vlaneseq
    %v71 = vshrl.u32 %v70, 7
    %v72 = vsub.s32 0, %v71
    %v73 = vrot.slane %v62, %v72
    %vm74 = vcmask 261120
    %v76 = vsel %vm74, %v64, 0
    %v79 = vsel %vm74, %v65, 0
    %81 = vmatprep.subr.mxu0 0.0
    %82 = vmatpush1.msra.mxu0 0.0
    %83 = vmatprep.subr.mxu0 0.0
    %84 = vmatpush1.msra.mxu0 0.0
    %85 = vmatprep.subr.mxu0 0.0
    %86 = vmatpush1.msra.mxu0 0.0
    %87 = vmatprep.subr.mxu0 0.0
    %88 = vmatpush1.msra.mxu0 0.0
    %89 = vmatprep.subr.mxu0 0.0
    %90 = vmatpush1.msra.mxu0 0.0
    %91 = vmatprep.subr.mxu0 0.0
    %92 = vmatpush1.msra.mxu0 0.0
    %93 = vmatprep.subr.mxu0 0.0
    %94 = vmatpush1.msra.mxu0 0.0
    %95 = vmatprep.subr.mxu0 0.0
    %96 = vmatpush1.msra.mxu0 0.0
    %97 = vmatprep.subr.mxu0 0.0
    %98 = vmatpush1.msra.mxu0 0.0
    %99 = vmatprep.subr.mxu0 0.0
    %100 = vmatpush1.msra.mxu0 0.0
    %101 = vmatprep.subr.mxu0 0.0
    %102 = vmatpush1.msra.mxu0 0.0
    %103 = vmatprep.subr.mxu0 0.0
    %104 = vmatpush1.msra.mxu0 0.0
    %105 = vmatprep.subr.mxu0 0.0
    %106 = vmatpush1.msra.mxu0 %v69
    %107 = vmatprep.subr.mxu0 0.0
    %108 = vmatpush1.msra.mxu0 %v68
    %109 = vmatprep.subr.mxu0 0.0
    %110 = vmatpush1.msra.mxu0 %v67
    %111 = vmatprep.subr.mxu0 0.0
    %112 = vmatpush1.msra.mxu0 %v66
    %113 = vmatprep.subr.mxu0 0.0
    %114 = vmatpush2.msra.mxu0 0.0
    %115 = vmatprep.subr.mxu0 0.0
    %116 = vmatpush2.msra.mxu0 0.0
    %117 = vmatprep.subr.mxu0 0.0
    %118 = vmatpush2.msra.mxu0 0.0
    %119 = vmatprep.subr.mxu0 0.0
    %120 = vmatpush2.msra.mxu0 0.0
    %121 = vmatprep.subr.mxu0 0.0
    %122 = vmatpush2.msra.mxu0 0.0
    %123 = vmatprep.subr.mxu0 0.0
    %124 = vmatpush2.msra.mxu0 0.0
    %125 = vmatprep.subr.mxu0 0.0
    %126 = vmatpush2.msra.mxu0 0.0
    %127 = vmatprep.subr.mxu0 0.0
    %128 = vmatpush2.msra.mxu0 0.0
    %129 = vmatprep.subr.mxu0 0.0
    %130 = vmatpush2.msra.mxu0 0.0
    %131 = vmatprep.subr.mxu0 0.0
    %132 = vmatpush2.msra.mxu0 0.0
    %133 = vmatprep.subr.mxu0 0.0
    %134 = vmatpush2.msra.mxu0 0.0
    %135 = vmatprep.subr.mxu0 0.0
    %136 = vmatpush2.msra.mxu0 0.0
    %137 = vmatprep.subr.mxu0 0.0
    %138 = vmatpush2.msra.mxu0 0.0
    %139 = vmatprep.subr.mxu0 0.0
    %140 = vmatpush2.msra.mxu0 0.0
    %141 = vmatprep.subr.mxu0 0.0
    %142 = vmatpush2.msra.mxu0 0.0
    %143 = vmatprep.subr.mxu0 0.0
    %144 = vmatpush2.msra.mxu0 0.0
    %145 = vmatprep.mubr.f32.mxu0 0.0
    %146 = vmatmul.mubr.f32.gmra.mxu0 %v76
    %v147 = vpop.f32.mrf.mxu0
    %v148 = vadd.f32 %v73, %v147
    %v149 = vpop.f32.mrf.mxu0
    %150 = vmatprep.mubr.f32.mxu0 0.0
    %151 = vmatmul.mubr.f32.gmra.mxu0 %v79
    %v152 = vpop.f32.mrf.mxu0
    %v153 = vadd.f32 %v73, %v152
    %v154 = vpop.f32.mrf.mxu0
    %155 = vdwg.mxu0
    %156 = vadd.xlane.f32.xlu0 %v148
    %v157 = vpop.xlane.xlu0 %156
    %158 = vadd.xlane.f32.xlu0 %v153
    %v159 = vpop.xlane.xlu0 %158
    %v160 = vmul.f32 %v157, 0.015625
    %v161 = vmul.f32 %v159, 0.015625
    %v162 = vsub.f32 %v148, %v160
    %v163 = vsub.f32 %v153, %v161
    %v164 = vlaneseq
    %v165 = vshrl.u32 %v164, 7
    %v166 = vsub.s32 3, %v165
    %v167 = vrot.slane %v63, %v166
    %v168 = vmul.f32 %v162, %v167
    %v169 = vmul.f32 %v163, %v167
    %v170 = vmul.f32 %v168, %v168
    %v171 = vmul.f32 %v169, %v169
    %172 = vadd.xlane.f32.xlu0 %v170
    %v173 = vpop.xlane.xlu0 %172
    %174 = vadd.xlane.f32.xlu0 %v171
    %v175 = vpop.xlane.xlu0 %174
    %v176 = vmul.f32 %v173, 0.015625
    %v177 = vmul.f32 %v175, 0.015625
    %v178 = vadd.f32 %v176, 1e-05
    %v179 = vadd.f32 %v177, 1e-05
    %v180 = vrsqrt.pop %v178
    %v181 = vrsqrt.pop %v179
    %v182 = vmul.f32 %v168, %v180
    %v183 = vmul.f32 %v169, %v181
    %v184 = vlaneseq
    %v185 = vshrl.u32 %v184, 7
    %v186 = vsub.s32 1, %v185
    %v187 = vrot.slane %v62, %v186
    %v188 = vmul.f32 %v182, %v187
    %v189 = vmul.f32 %v183, %v187
    %v190 = vlaneseq
    %v191 = vshrl.u32 %v190, 7
    %v192 = vsub.s32 2, %v191
    %v193 = vrot.slane %v62, %v192
    %v194 = vadd.f32 %v188, %v193
    %v195 = vadd.f32 %v189, %v193
    %v196 = vld [vmem:[%s1] sm:$0xff]
    %v197 = vld [vmem:[%s1 + $0x8] sm:$0xff]
    %200 = vrot.lane.b32.xlu0 %v196, 1
    %v201 = vpop.permute.xlu0 %200
    %202 = vrot.lane.b32.xlu0 %v197, 1
    %v203 = vpop.permute.xlu0 %202
    %v206 = vsub.f32 %v196, %v201
    %v207 = vsub.f32 %v197, %v203
    %210 = vrot.lane.b32.xlu0 %v206, 2
    %v211 = vpop.permute.xlu0 %210
    %212 = vrot.lane.b32.xlu0 %v207, 2
    %v213 = vpop.permute.xlu0 %212
    %v216 = vmul.f32 %v206, %v211
    %v217 = vmul.f32 %v207, %v213
    %218 = vset.pattern.permute.xlu0 0
    %219 = vperm.xlu0 %218, %v196
    %v220 = vpop.permute.xlu0 %219
    %222 = vset.pattern.permute.xlu0 0
    %223 = vperm.xlu0 %222, %v197
    %v224 = vpop.permute.xlu0 %223
    %v226 = vlaneseq
    %v227 = vshrl.u32 %v226, 7
    %v228 = vsub.s32 3, %v227
    %v229 = vrot.slane %v62, %v228
    %v230 = vmul.f32 %v220, %v229
    %v231 = vmul.f32 %v224, %v229
    %232 = vset.pattern.permute.xlu0 1
    %233 = vperm.xlu0 %232, %v196
    %v234 = vpop.permute.xlu0 %233
    %236 = vset.pattern.permute.xlu0 1
    %237 = vperm.xlu0 %236, %v197
    %v238 = vpop.permute.xlu0 %237
    %v240 = vlaneseq
    %v241 = vshrl.u32 %v240, 7
    %v242 = vsub.s32 4, %v241
    %v243 = vrot.slane %v62, %v242
    %v244 = vmul.f32 %v234, %v243
    %v245 = vmul.f32 %v238, %v243
    %v246 = vadd.f32 %v230, %v244
    %v247 = vadd.f32 %v231, %v245
    %248 = vset.pattern.permute.xlu0 2
    %249 = vperm.xlu0 %248, %v196
    %v250 = vpop.permute.xlu0 %249
    %252 = vset.pattern.permute.xlu0 2
    %253 = vperm.xlu0 %252, %v197
    %v254 = vpop.permute.xlu0 %253
    %v256 = vlaneseq
    %v257 = vshrl.u32 %v256, 7
    %v258 = vsub.s32 5, %v257
    %v259 = vrot.slane %v62, %v258
    %v260 = vmul.f32 %v250, %v259
    %v261 = vmul.f32 %v254, %v259
    %v262 = vadd.f32 %v246, %v260
    %v263 = vadd.f32 %v247, %v261
    %264 = vset.pattern.permute.xlu0 3
    %265 = vperm.xlu0 %264, %v196
    %v266 = vpop.permute.xlu0 %265
    %268 = vset.pattern.permute.xlu0 3
    %269 = vperm.xlu0 %268, %v197
    %v270 = vpop.permute.xlu0 %269
    %v272 = vlaneseq
    %v273 = vshrl.u32 %v272, 7
    %v274 = vsub.s32 6, %v273
    %v275 = vrot.slane %v62, %v274
    %v276 = vmul.f32 %v266, %v275
    %v277 = vmul.f32 %v270, %v275
    %v278 = vadd.f32 %v262, %v276
    %v279 = vadd.f32 %v263, %v277
    %281 = vset.pattern.permute.xlu0 3
    %282 = vperm.xlu0 %281, %v216
    %v283 = vpop.permute.xlu0 %282
    %286 = vset.pattern.permute.xlu0 3
    %287 = vperm.xlu0 %286, %v217
    %v288 = vpop.permute.xlu0 %287
    %v290 = vlaneseq
    %v291 = vshrl.u32 %v290, 7
    %v292 = vsub.s32 7, %v291
    %v293 = vrot.slane %v62, %v292
    %v294 = vmul.f32 %v283, %v293
    %v295 = vmul.f32 %v288, %v293
    %v296 = vadd.f32 %v278, %v294
    %v297 = vadd.f32 %v279, %v295
    %v298 = vlaneseq
    %v299 = vshrl.u32 %v298, 7
    %v300 = vsub.s32 0, %v299
    %v301 = vrot.slane %v63, %v300
    %v302 = vadd.f32 %v296, %v301
    %v303 = vadd.f32 %v297, %v301
    %304 = vadd.xlane.f32.xlu0 %v302
    %v305 = vpop.xlane.xlu0 %304
    %306 = vadd.xlane.f32.xlu0 %v303
    %v307 = vpop.xlane.xlu0 %306
    %v308 = vmul.f32 %v305, 0.015625
    %v309 = vmul.f32 %v307, 0.015625
    %v310 = vsub.f32 %v302, %v308
    %v311 = vsub.f32 %v303, %v309
    %v312 = vmul.f32 %v310, %v167
    %v313 = vmul.f32 %v311, %v167
    %v314 = vmul.f32 %v312, %v312
    %v315 = vmul.f32 %v313, %v313
    %316 = vadd.xlane.f32.xlu0 %v314
    %v317 = vpop.xlane.xlu0 %316
    %318 = vadd.xlane.f32.xlu0 %v315
    %v319 = vpop.xlane.xlu0 %318
    %v320 = vmul.f32 %v317, 0.015625
    %v321 = vmul.f32 %v319, 0.015625
    %v322 = vadd.f32 %v320, 1e-05
    %v323 = vadd.f32 %v321, 1e-05
    %v324 = vrsqrt.pop %v322
    %v325 = vrsqrt.pop %v323
    %v326 = vmul.f32 %v312, %v324
    %v327 = vmul.f32 %v313, %v325
    %v328 = vlaneseq
    %v329 = vshrl.u32 %v328, 7
    %v330 = vsub.s32 1, %v329
    %v331 = vrot.slane %v63, %v330
    %v332 = vmul.f32 %v326, %v331
    %v333 = vmul.f32 %v327, %v331
    %v334 = vlaneseq
    %v335 = vshrl.u32 %v334, 7
    %v336 = vsub.s32 2, %v335
    %v337 = vrot.slane %v63, %v336
    %v338 = vadd.f32 %v332, %v337
    %v339 = vadd.f32 %v333, %v337
    %v340 = vadd.f32 %v194, %v338
    %v341 = vadd.f32 %v195, %v339
    %v342 = vld [vmem:[#allocation7] sm:$0xff]
    %v343 = vld [vmem:[#allocation7 + $0x8] sm:$0xff]
    %v344 = vadd.f32 %v340, %v342
    %v345 = vadd.f32 %v341, %v343
    %346 = vst [vmem:[#allocation8] sm:$0xff] %v344
    %347 = vst [vmem:[#allocation8 + $0x8] sm:$0xff] %v345
    // Predicated region
    $region34: #{tpu_custom_call.1} parent=1 // pred_check
      _
    $region35: #{tpu_custom_call.1} parent=1 // pred_check_branch
      %349 = sbr.rel (0) target = $region37
    $region36: #{tpu_custom_call.1} parent=1 // pred_region
      %s351 = ssub.s32 256, 256
      %352 = vsyncadd [#allocation4], %s351
      %s353 = sshll.u32 [#allocation8], 4
      %s354 = int_to_ptr.vmem [resolvable:$true] %s353
      %359 = dma.vmem_to_hbm [thread:$0]  %s354, 256, %s5, [#allocation4], 128, 128, 8
    $region37: #{tpu_custom_call.1} parent=1 // pred_fallthru
      _
    // Predicated region
    $region38: #{tpu_custom_call.1} parent=1 // pred_check
      _
    $region39: #{tpu_custom_call.1} parent=1 // pred_check_branch
      %361 = sbr.rel (0) target = $region41
    $region40: #{tpu_custom_call.1} parent=1 // pred_region
      %362 = dma.done [#allocation4], 256
    $region41: #{tpu_custom_call.1} parent=1 // pred_fallthru
      _
    %363 = vsyncpa [#allocation3], 1
    %364 = vsyncpa [#allocation6], 1
    %365 = vsyncpa [#allocation4], 1

</llo_original>
